<compile_context>
chip_gen: v5e
topology: v5e:2x2
jax: 0.10.0
libtpu: 0.0.40
codegen_flags: <defaults>
</compile_context>

<pallas_src>
import functools

import jax
import jax.numpy as jnp
from jax import lax
from jax.experimental import pallas as pl
from jax.experimental.pallas import tpu as pltpu

LANES = 128            # vreg lane width
MAX_TILE_ROWS = 8192   # 8192 * 128 * 4 B = 4 MiB per f32 input tile (2 MiB bf16)
CHUNK_ROWS = 64        # rows per in-kernel fold chunk; keeps live vregs < 64
VMEM_LIMIT_BYTES = 32 * 1024 * 1024


def _qfocal_elementwise(x, y, *, alpha, gamma, in_kernel=True):
    """Elementwise quality focal loss (BCE-with-logits base), all float32."""
    # Numerically stable BCE with logits; exp(-|x|) is reused for the sigmoid.
    e = jnp.exp(-jnp.abs(x))
    bce = jnp.maximum(x, 0.0) - x * y + jnp.log1p(e)

    denom = 1.0 + e
    inv = pl.reciprocal(denom, approx=False) if in_kernel else 1.0 / denom
    p = jnp.where(x >= 0.0, inv, e * inv)           # == sigmoid(x)

    alpha_factor = (1.0 - alpha) + (2.0 * alpha - 1.0) * y
    d = jnp.abs(y - p)
    if gamma == 1.5:            # module default: |d|^1.5 == d * sqrt(d)
        mod = d * jnp.sqrt(d)
    elif gamma == 2.0:
        mod = d * d
    elif gamma == 1.0:
        mod = d
    else:
        mod = d ** gamma
    return bce * alpha_factor * mod


def _chunk_rows(tile_rows):
    """Largest power-of-two multiple of 8 that divides tile_rows, <= CHUNK_ROWS."""
    chunk = 8
    while chunk * 2 <= CHUNK_ROWS and tile_rows % (chunk * 2) == 0:
        chunk *= 2
    return chunk


def _loop_unroll(n_chunks):
    return True if n_chunks <= 8 else 8


def _qfocal_partial_sum_kernel(pred_ref, true_ref, out_ref, *, alpha, gamma,
                               last_tile, valid_rows_last, needs_mask):
    """Per-tile elementwise loss folded into an (8, 128) partial-sum block."""
    tile_rows, lanes = pred_ref.shape
    chunk = _chunk_rows(tile_rows)
    n_chunks = tile_rows // chunk

    def fold(valid_rows):
        def body(c, acc):
            r0 = pl.multiple_of(c * chunk, chunk)
            x = pred_ref[pl.ds(r0, chunk), :].astype(jnp.float32)
            y = true_ref[pl.ds(r0, chunk), :].astype(jnp.float32)
            loss = _qfocal_elementwise(x, y, alpha=alpha, gamma=gamma)
            if valid_rows is not None:
                # Select (not multiply) so OOB-row garbage (NaN/Inf) cannot leak.
                row = r0 + lax.broadcasted_iota(jnp.int32, (chunk, lanes), 0)
                loss = jnp.where(row < valid_rows, loss, 0.0)
            # (chunk,128) -> (chunk//8, 8, 128) is a native re-tiling; the
            # axis-0 sum is pure vreg-wise VPU adds (no per-chunk XLU reduce).
            return acc + jnp.sum(loss.reshape(chunk // 8, 8, lanes), axis=0)

        acc0 = jnp.zeros((8, lanes), jnp.float32)
        return lax.fori_loop(0, n_chunks, body, acc0,
                             unroll=_loop_unroll(n_chunks))

    if needs_mask:
        i = pl.program_id(0)

        @pl.when(i != last_tile)
        def _():
            out_ref[...] = fold(None)

        @pl.when(i == last_tile)
        def _():
            # Only the last tile can contain out-of-bounds rows.
            out_ref[...] = fold(valid_rows_last)
    else:
        out_ref[...] = fold(None)


def _qfocal_map_kernel(pred_ref, true_ref, out_ref, *, alpha, gamma):
    """Elementwise loss map (reduction='none'), chunked to bound live vregs."""
    tile_rows, _ = pred_ref.shape
    chunk = _chunk_rows(tile_rows)
    n_chunks = tile_rows // chunk

    def body(c, carry):
        r0 = pl.multiple_of(c * chunk, chunk)
        x = pred_ref[pl.ds(r0, chunk), :].astype(jnp.float32)
        y = true_ref[pl.ds(r0, chunk), :].astype(jnp.float32)
        loss = _qfocal_elementwise(x, y, alpha=alpha, gamma=gamma)
        out_ref[pl.ds(r0, chunk), :] = loss.astype(out_ref.dtype)
        return carry

    lax.fori_loop(0, n_chunks, body, 0, unroll=_loop_unroll(n_chunks))


def qfocal_loss(pred, true, gamma=1.5, alpha=0.25, reduction="mean"):
    """Pallas TPU implementation of QFocalLoss.forward (BCEWithLogitsLoss base)."""
    assert pred.shape == true.shape
    orig_shape = pred.shape
    n_total = int(pred.size)
    out_dtype = jnp.promote_types(pred.dtype, true.dtype)
    gamma = float(gamma)
    alpha = float(alpha)

    pred_flat = pred.reshape(-1)
    true_flat = true.reshape(-1)
    n_aligned = (n_total // LANES) * LANES
    n_tail = n_total - n_aligned

    compiler_params = pltpu.CompilerParams(
        dimension_semantics=("parallel",),
        vmem_limit_bytes=VMEM_LIMIT_BYTES,
    )

    # Ragged (<128-element) tail handled with plain jnp — no full-array pad.
    tail_loss = None
    if n_tail:
        x_t = pred_flat[n_aligned:].astype(jnp.float32)
        y_t = true_flat[n_aligned:].astype(jnp.float32)
        tail_loss = _qfocal_elementwise(x_t, y_t, alpha=alpha, gamma=gamma,
                                        in_kernel=False)

    rows = n_aligned // LANES
    if rows:
        if n_tail:
            # Only the aligned prefix goes through the kernel. (XLA may still
            # materialize this prefix slice; the common aligned case is a free
            # reshape and pays no copy at all.)
            pred2d = pred_flat[:n_aligned].reshape(rows, LANES)
            true2d = true_flat[:n_aligned].reshape(rows, LANES)
        else:
            pred2d = pred_flat.reshape(rows, LANES)   # free reshape
            true2d = true_flat.reshape(rows, LANES)

        # >= 2 grid steps whenever possible so the "parallel" axis spans both
        # TensorCores on v7x; tile capped at 8192 rows (<= 4 MiB f32 / input).
        tile_rows = min(MAX_TILE_ROWS, max(8, ((pl.cdiv(rows, 2) + 7) // 8) * 8))
        num_tiles = pl.cdiv(rows, tile_rows)
        needs_mask = num_tiles * tile_rows != rows
        valid_rows_last = rows - (num_tiles - 1) * tile_rows

        in_specs = [
            pl.BlockSpec((tile_rows, LANES), lambda i: (i, 0)),
            pl.BlockSpec((tile_rows, LANES), lambda i: (i, 0)),
        ]

    if reduction in ("mean", "sum"):
        total = jnp.float32(0.0)
        if rows:
            kernel = functools.partial(
                _qfocal_partial_sum_kernel, alpha=alpha, gamma=gamma,
                last_tile=num_tiles - 1, valid_rows_last=valid_rows_last,
                needs_mask=needs_mask)
            partials = pl.pallas_call(
                kernel,
                out_shape=jax.ShapeDtypeStruct((num_tiles * 8, LANES), jnp.float32),
                grid=(num_tiles,),
                in_specs=in_specs,
                out_specs=pl.BlockSpec((8, LANES), lambda i: (i, 0)),
                compiler_params=compiler_params,
            )(pred2d, true2d)
            total = total + jnp.sum(partials)
        if n_tail:
            total = total + jnp.sum(tail_loss)
        if reduction == "mean":
            total = total / jnp.float32(n_total)
        return total.astype(out_dtype)

    # reduction == 'none': elementwise loss map in the promoted input dtype.
    parts = []
    if rows:
        kernel = functools.partial(_qfocal_map_kernel, alpha=alpha, gamma=gamma)
        main_map = pl.pallas_call(
            kernel,
            out_shape=jax.ShapeDtypeStruct((rows, LANES), out_dtype),
            grid=(num_tiles,),
            in_specs=in_specs,
            out_specs=pl.BlockSpec((tile_rows, LANES), lambda i: (i, 0)),
            compiler_params=compiler_params,
        )(pred2d, true2d)
        if not n_tail:
            return main_map.reshape(orig_shape)
        parts.append(main_map.reshape(-1))
    if n_tail:
        parts.append(tail_loss.astype(out_dtype))
    return jnp.concatenate(parts).reshape(orig_shape)


def _reference(pred, true, gamma=1.5, alpha=0.25, reduction="mean"):
    x = pred.astype(jnp.float32)
    y = true.astype(jnp.float32)
    bce = jnp.maximum(x, 0.0) - x * y + jnp.log1p(jnp.exp(-jnp.abs(x)))
    p = jax.nn.sigmoid(x)
    alpha_factor = y * alpha + (1.0 - y) * (1.0 - alpha)
    mod = jnp.abs(y - p) ** gamma
    loss = bce * alpha_factor * mod
    if reduction == "mean":
        return jnp.mean(loss)
    if reduction == "sum":
        return jnp.sum(loss)
    return loss


if __name__ == "__main__":
    key = jax.random.PRNGKey(0)
    k1, k2, k3, k4 = jax.random.split(key, 4)

    # Small NCHW logits map consistent with a detection head (lane-aligned size).
    pred = jax.random.normal(k1, (2, 4, 16, 16), dtype=jnp.float32)
    true = jax.random.uniform(k2, (2, 4, 16, 16), dtype=jnp.float32)

    loss = jax.block_until_ready(qfocal_loss(pred, true, gamma=1.5, alpha=0.25))
    ref = jax.block_until_ready(_reference(pred, true, gamma=1.5, alpha=0.25))
    assert jnp.allclose(loss, ref, rtol=1e-5, atol=1e-6), (loss, ref)

    # Ragged size (not a multiple of 128): aligned-prefix kernel + jnp tail,
    # and the last-tile row mask path inside the kernel.
    pred_r = jax.random.normal(k3, (3, 5, 7, 11), dtype=jnp.float32)
    true_r = jax.random.uniform(k4, (3, 5, 7, 11), dtype=jnp.float32)
    loss_r = jax.block_until_ready(qfocal_loss(pred_r, true_r))
    ref_r = jax.block_until_ready(_reference(pred_r, true_r))
    assert jnp.allclose(loss_r, ref_r, rtol=1e-5, atol=1e-6), (loss_r, ref_r)

    # 'none' reduction: aligned (pure kernel map) and ragged (kernel + jnp tail).
    loss_map = jax.block_until_ready(qfocal_loss(pred, true, reduction="none"))
    ref_map = jax.block_until_ready(_reference(pred, true, reduction="none"))
    assert jnp.allclose(loss_map, ref_map, rtol=1e-5, atol=1e-6)

    loss_map_r = jax.block_until_ready(qfocal_loss(pred_r, true_r, reduction="none"))
    ref_map_r = jax.block_until_ready(_reference(pred_r, true_r, reduction="none"))
    assert jnp.allclose(loss_map_r, ref_map_r, rtol=1e-5, atol=1e-6)

    # bf16 inputs: half the HBM read bytes; kernel upcasts per-vreg to f32.
    pred_b = pred.astype(jnp.bfloat16)
    true_b = true.astype(jnp.bfloat16)
    loss_b = jax.block_until_ready(qfocal_loss(pred_b, true_b))
    ref_b = jax.block_until_ready(
        _reference(pred_b.astype(jnp.float32), true_b.astype(jnp.float32)))
    assert jnp.allclose(loss_b.astype(jnp.float32), ref_b, rtol=5e-2, atol=1e-3), (
        loss_b, ref_b)

    print("KERNEL_OK")
</pallas_src>

<mosaic_0001>
module attributes {stable_mosaic.version = 11 : i64} {
  func.func @_qfocal_partial_sum_kernel(%arg0: i32, %arg1: memref<8x128xf32, #tpu.memory_space<vmem>>, %arg2: memref<8x128xf32, #tpu.memory_space<vmem>>, %arg3: memref<8x128xf32, #tpu.memory_space<vmem>>) attributes {dimension_semantics = [#tpu.dimension_semantics<parallel>], iteration_bounds = array<i64: 2>, scalar_prefetch = 0 : i64, scratch_operands = 0 : i64, tpu.core_type = #tpu.core_type<tc>, window_params = [{transform_indices = @transform_0, window_bounds = array<i64: 8, 128>}, {transform_indices = @transform_1, window_bounds = array<i64: 8, 128>}, {transform_indices = @transform_2, window_bounds = array<i64: 8, 128>}]} {
    %cst = arith.constant 0.000000e+00 : f32
    %0 = vector.broadcast %cst : f32 to vector<8x128xf32>
    %c0_i32 = arith.constant 0 : i32
    %c8_i32 = arith.constant 8 : i32
    %1 = arith.muli %c0_i32, %c8_i32 : i32
    %2 = tpu.assume_multiple %1, 8 : i32
    %3 = arith.index_cast %2 : i32 to index
    %c0 = arith.constant 0 : index
    %4 = vector.load %arg1[%3, %c0] : memref<8x128xf32, #tpu.memory_space<vmem>>, vector<8x128xf32>
    %5 = arith.index_cast %2 : i32 to index
    %c0_0 = arith.constant 0 : index
    %6 = vector.load %arg2[%5, %c0_0] : memref<8x128xf32, #tpu.memory_space<vmem>>, vector<8x128xf32>
    %7 = math.absf %4 : vector<8x128xf32>
    %cst_1 = arith.constant 0.000000e+00 : f32
    %8 = vector.broadcast %cst_1 : f32 to vector<8x128xf32>
    %9 = arith.subf %8, %7 : vector<8x128xf32>
    %10 = math.exp %9 : vector<8x128xf32>
    %cst_2 = arith.constant 0.000000e+00 : f32
    %11 = vector.broadcast %cst_2 : f32 to vector<8x128xf32>
    %12 = arith.maximumf %4, %11 : vector<8x128xf32>
    %13 = arith.mulf %4, %6 : vector<8x128xf32>
    %14 = arith.subf %12, %13 : vector<8x128xf32>
    %15 = math.log1p %10 : vector<8x128xf32>
    %16 = arith.addf %14, %15 : vector<8x128xf32>
    %cst_3 = arith.constant 1.000000e+00 : f32
    %17 = vector.broadcast %cst_3 : f32 to vector<8x128xf32>
    %18 = arith.addf %17, %10 : vector<8x128xf32>
    %19 = tpu.reciprocal %18 : vector<8x128xf32> -> vector<8x128xf32>
    %cst_4 = arith.constant 0.000000e+00 : f32
    %20 = vector.broadcast %cst_4 : f32 to vector<8x128xf32>
    %21 = arith.cmpf oge, %4, %20 : vector<8x128xf32>
    %22 = arith.mulf %10, %19 : vector<8x128xf32>
    %23 = arith.select %21, %19, %22 : vector<8x128xi1>, vector<8x128xf32>
    %cst_5 = arith.constant -5.000000e-01 : f32
    %24 = vector.broadcast %cst_5 : f32 to vector<8x128xf32>
    %25 = arith.mulf %24, %6 : vector<8x128xf32>
    %cst_6 = arith.constant 7.500000e-01 : f32
    %26 = vector.broadcast %cst_6 : f32 to vector<8x128xf32>
    %27 = arith.addf %26, %25 : vector<8x128xf32>
    %28 = arith.subf %6, %23 : vector<8x128xf32>
    %29 = math.absf %28 : vector<8x128xf32>
    %30 = math.sqrt %29 : vector<8x128xf32>
    %31 = arith.mulf %29, %30 : vector<8x128xf32>
    %32 = arith.mulf %16, %27 : vector<8x128xf32>
    %33 = arith.mulf %32, %31 : vector<8x128xf32>
    %34 = vector.shape_cast %33 : vector<8x128xf32> to vector<1x8x128xf32>
    %cst_7 = arith.constant dense<0.000000e+00> : vector<8x128xf32>
    %35 = vector.multi_reduction <add>, %34, %cst_7 [0] : vector<1x8x128xf32> to vector<8x128xf32>
    %36 = arith.addf %0, %35 : vector<8x128xf32>
    %c1_i32 = arith.constant 1 : i32
    %c0_8 = arith.constant 0 : index
    %c0_9 = arith.constant 0 : index
    %37 = vector.load %arg3[%c0_8, %c0_9] : memref<8x128xf32, #tpu.memory_space<vmem>>, vector<8x128xf32>
    tpu.vector_store %arg3[%c0_8, %c0_9], %36 {strides = array<i32>} : memref<8x128xf32, #tpu.memory_space<vmem>>, vector<8x128xf32>,
    return
  }
  func.func @transform_0(%arg0: i32) -> (i32, i32) {
    %c0_i32 = arith.constant 0 : i32
    %c0_i32_0 = arith.constant 0 : i32
    return %arg0, %c0_i32 : i32, i32
  }
  func.func @transform_1(%arg0: i32) -> (i32, i32) {
    %c0_i32 = arith.constant 0 : i32
    %c0_i32_0 = arith.constant 0 : i32
    return %arg0, %c0_i32 : i32, i32
  }
  func.func @transform_2(%arg0: i32) -> (i32, i32) {
    %c0_i32 = arith.constant 0 : i32
    %c0_i32_0 = arith.constant 0 : i32
    return %arg0, %c0_i32 : i32, i32
  }
}

</mosaic_0001>

<llo_original>
// kernel: tpu_custom_call.1
$region0: #{tpu_custom_call.1}
  #allocation0 [shape = 'u32[]', space=smem, size = 0x4, offset = 0x4, fixed_abs, tag = 'smem constant byte address 0x4 - core index']
  #allocation1 [shape = 'u32[72,128]{1,0:T(1,128)}', space=vmem, size = 0x9000, scoped, tag = 'internal scratch']
  %s0 = inlined_call_operand.hbm [shape: f32[16,128], index: 0, kind: input, shape index: {}]
  %s1 = inlined_call_operand.hbm [shape: f32[16,128], index: 1, kind: input, shape index: {}]
  %s2 = inlined_call_operand.hbm [shape: f32[16,128], index: 2, kind: output, shape index: {}]
  %s3 = sld [smem:[#allocation0]]
  $region49: #{tpu_custom_call.1} parent=0
    _
  %s5 = ssub.s32 1, %s3
  %s6 = scalar_select 0, %s5, %s3
  $region1: #{tpu_custom_call.1} parent=0
    #allocation2 [shape = 'u8[8192]{0}', space=vmem, size = 0x2000, scoped, tag = 'input window, operand 0']
    #allocation3 [shape = 's32[2]{0}', space=sflag, size = 0x8, scoped, tag = 'scoped memory for tpu_custom_call.1']
    #allocation4 [shape = 's32[2]{0}', space=sflag, size = 0x8, scoped, tag = 'scoped memory for tpu_custom_call.1']
    #allocation5 [shape = 'u8[8192]{0}', space=vmem, size = 0x2000, scoped, tag = 'input window, operand 1']
    #allocation6 [shape = 's32[2]{0}', space=sflag, size = 0x8, scoped, tag = 'scoped memory for tpu_custom_call.1']
    #allocation7 [shape = 'u8[8192]{0}', space=vmem, size = 0x2000, scoped, tag = 'output window, operand 0']
    %7 = vsyncpa [#allocation3], 0
    %s8 = scalar_lea.sflag [#allocation3], 1
    %9 = vsyncpa %s8, 0
    %10 = vsyncpa [#allocation6], 0
    %s11 = scalar_lea.sflag [#allocation6], 1
    %12 = vsyncpa %s11, 0
    %13 = vsyncpa [#allocation4], 0
    %s14 = scalar_lea.sflag [#allocation4], 1
    %15 = vsyncpa %s14, 0
    loop: start=0, step=1, limit=4
    $region2: #{tpu_custom_call.1} parent=1 // loop_pre_header
      _
    $region3: #{tpu_custom_call.1} parent=1 // loop_header
      %s17 = sphi 0, %s21
      %p18 = scmp.ge.s32.totalorder %s17, 4
      %s27 = sphi 0, %s29
      %s30 = sphi 0, %s27
      %s31 = sphi 0, %s30
      %s47 = sphi 0, %s31
      %s53 = sphi 0, %s55
      %s56 = sphi 0, %s53
      %s57 = sphi 0, %s56
      %s73 = sphi 0, %s57
      %s79 = sphi 0, %s81
      %s82 = sphi 0, %s79
      %s83 = sphi 0, %s82
      %s99 = sphi 0, %s83
    $region4: #{tpu_custom_call.1} parent=1 // loop_header_branch
      %20 = sbr.rel (%p18) target = $region8
    $region5: #{tpu_custom_call.1} parent=1 // loop_body
      %s22 = ssub.s32 %s17, 1
      %s23 = ssub.s32 %s17, 2
      %s24 = sadd.s32 %s17, 1
      %s25 = ssub.s32 %s17, %s24
      %p26 = scmp.eq.s32.totalorder %s25, 0
      %s28 = sadd.s32 %s27, 1
      %s29 = scalar_select %p26, %s27, %s28
      %p32 = pneg %p26
      %p33 = scmp.eq.s32.totalorder %s17, 1
      %p34 = por %p32, %p33
      %p35 = scmp.ne.s32.totalorder %s27, %s30
      %p36 = scmp.eq.s32.totalorder %s17, 0
      %p37 = por %p35, %p36
      %p38 = scmp.ne.s32.totalorder %s27, %s30
      %p39 = scmp.eq.s32.totalorder %s22, 1
      %p40 = por %p38, %p39
      %p41 = scmp.ne.s32.totalorder %s30, %s31
      %p42 = scmp.eq.s32.totalorder %s22, 0
      %p43 = por %p41, %p42
      %p44 = scmp.ne.s32.totalorder %s30, %s31
      %p45 = scmp.eq.s32.totalorder %s23, 1
      %p46 = por %p44, %p45
      %p48 = scmp.ne.s32.totalorder %s31, %s47
      %p49 = scmp.eq.s32.totalorder %s23, 0
      %p50 = por %p48, %p49
      %s51 = ssub.s32 %s17, %s24
      %p52 = scmp.eq.s32.totalorder %s51, 0
      %s54 = sadd.s32 %s53, 1
      %s55 = scalar_select %p52, %s53, %s54
      %p58 = pneg %p52
      %p59 = scmp.eq.s32.totalorder %s17, 1
      %p60 = por %p58, %p59
      %p61 = scmp.ne.s32.totalorder %s53, %s56
      %p62 = scmp.eq.s32.totalorder %s17, 0
      %p63 = por %p61, %p62
      %p64 = scmp.ne.s32.totalorder %s53, %s56
      %p65 = scmp.eq.s32.totalorder %s22, 1
      %p66 = por %p64, %p65
      %p67 = scmp.ne.s32.totalorder %s56, %s57
      %p68 = scmp.eq.s32.totalorder %s22, 0
      %p69 = por %p67, %p68
      %p70 = scmp.ne.s32.totalorder %s56, %s57
      %p71 = scmp.eq.s32.totalorder %s23, 1
      %p72 = por %p70, %p71
      %p74 = scmp.ne.s32.totalorder %s57, %s73
      %p75 = scmp.eq.s32.totalorder %s23, 0
      %p76 = por %p74, %p75
      %s77 = ssub.s32 %s17, %s24
      %p78 = scmp.eq.s32.totalorder %s77, 0
      %s80 = sadd.s32 %s79, 1
      %s81 = scalar_select %p78, %s79, %s80
      %p84 = pneg %p78
      %p85 = scmp.eq.s32.totalorder %s17, 1
      %p86 = por %p84, %p85
      %p87 = scmp.ne.s32.totalorder %s79, %s82
      %p88 = scmp.eq.s32.totalorder %s17, 0
      %p89 = por %p87, %p88
      %p90 = scmp.ne.s32.totalorder %s79, %s82
      %p91 = scmp.eq.s32.totalorder %s22, 1
      %p92 = por %p90, %p91
      %p93 = scmp.ne.s32.totalorder %s82, %s83
      %p94 = scmp.eq.s32.totalorder %s22, 0
      %p95 = por %p93, %p94
      %p96 = scmp.ne.s32.totalorder %s82, %s83
      %p97 = scmp.eq.s32.totalorder %s23, 1
      %p98 = por %p96, %p97
      %p100 = scmp.ne.s32.totalorder %s83, %s99
      %p101 = scmp.eq.s32.totalorder %s23, 0
      %p102 = por %p100, %p101
      %p103 = scmp.le.s32.totalorder 1, %s17
      %p104 = scmp.lt.s32.totalorder %s17, 3
      %p105 = pnand %p103, %p104
      %p106 = pneg %p105
      // Predicated region
      $region9: #{tpu_custom_call.1} parent=5 // pred_check
        _
      $region10: #{tpu_custom_call.1} parent=5 // pred_check_branch
        %108 = sbr.rel (%p105) target = $region12
      $region11: #{tpu_custom_call.1} parent=5 // pred_region
        %s109 = ssub.s32 %s17, 1
      $region12: #{tpu_custom_call.1} parent=5 // pred_fallthru
        _
      %p110 = scmp.lt.s32.totalorder %s17, 2
      // Predicated region
      $region13: #{tpu_custom_call.1} parent=5 // pred_check
        %p111 = pneg %p110
      $region14: #{tpu_custom_call.1} parent=5 // pred_check_branch
        %113 = sbr.rel (%p111) target = $region16
      $region15: #{tpu_custom_call.1} parent=5 // pred_region
        // Predicated region
        $region17: #{tpu_custom_call.1} parent=15 // pred_check
          %p114 = pneg %p37
        $region18: #{tpu_custom_call.1} parent=15 // pred_check_branch
          %116 = sbr.rel (%p114) target = $region20
        $region19: #{tpu_custom_call.1} parent=15 // pred_region
          %s117 = sand.u32 %s27, 1
          %s118 = scalar_lea.sflag [#allocation3], %s117
          %s119 = sand.u32 %s27, 1
          %s120 = smul.addr %s119, 8
          %s121 = scalar_lea.vmem [#allocation2], %s120
          %123 = vsyncadd %s118, 0
          %s124 = smul.addr %s17, 8
          %s125 = scalar_lea.hbm %s0, %s124
          %s127 = sshll.u32 %s125, 4
          %s128 = int_to_ptr.hbm [resolvable:$true] %s127
          %s129 = sshll.u32 %s121, 4
          %s130 = int_to_ptr.vmem [resolvable:$true] %s129
          %132 = dma.hbm_to_vmem [thread:$0]  %s128, 128, %s130, %s118
        $region20: #{tpu_custom_call.1} parent=15 // pred_fallthru
          _
        // Predicated region
        $region21: #{tpu_custom_call.1} parent=15 // pred_check
          %p133 = pneg %p63
        $region22: #{tpu_custom_call.1} parent=15 // pred_check_branch
          %135 = sbr.rel (%p133) target = $region24
        $region23: #{tpu_custom_call.1} parent=15 // pred_region
          %s136 = sand.u32 %s53, 1
          %s137 = scalar_lea.sflag [#allocation6], %s136
          %s138 = sand.u32 %s53, 1
          %s139 = smul.addr %s138, 8
          %s140 = scalar_lea.vmem [#allocation5], %s139
          %142 = vsyncadd %s137, 0
          %s143 = smul.addr %s17, 8
          %s144 = scalar_lea.hbm %s1, %s143
          %s146 = sshll.u32 %s144, 4
          %s147 = int_to_ptr.hbm [resolvable:$true] %s146
          %s148 = sshll.u32 %s140, 4
          %s149 = int_to_ptr.vmem [resolvable:$true] %s148
          %151 = dma.hbm_to_vmem [thread:$0]  %s147, 128, %s149, %s137
        $region24: #{tpu_custom_call.1} parent=15 // pred_fallthru
          _
      $region16: #{tpu_custom_call.1} parent=5 // pred_fallthru
        _
      %p152 = scmp.le.s32.totalorder 1, %s17
      %p153 = scmp.lt.s32.totalorder %s17, 3
      %p154 = pnand %p152, %p153
      %p155 = pneg %p154
      // Predicated region
      $region25: #{tpu_custom_call.1} parent=5 // pred_check
        _
      $region26: #{tpu_custom_call.1} parent=5 // pred_check_branch
        %157 = sbr.rel (%p154) target = $region28
      $region27: #{tpu_custom_call.1} parent=5 // pred_region
        %s158 = ssub.s32 %s17, 1
        %s159 = sand.u32 %s30, 1
        %s160 = scalar_lea.sflag [#allocation3], %s159
        %s161 = sand.u32 %s30, 1
        %s162 = smul.addr %s161, 8
        %s163 = scalar_lea.vmem [#allocation2], %s162
        // Predicated region
        $region29: #{tpu_custom_call.1} parent=27 // pred_check
          %p164 = pneg %p43
        $region30: #{tpu_custom_call.1} parent=27 // pred_check_branch
          %166 = sbr.rel (%p164) target = $region32
        $region31: #{tpu_custom_call.1} parent=27 // pred_region
          %168 = dma.done %s160, 128
        $region32: #{tpu_custom_call.1} parent=27 // pred_fallthru
          _
        %s169 = sand.u32 %s56, 1
        %s170 = scalar_lea.sflag [#allocation6], %s169
        %s171 = sand.u32 %s56, 1
        %s172 = smul.addr %s171, 8
        %s173 = scalar_lea.vmem [#allocation5], %s172
        // Predicated region
        $region33: #{tpu_custom_call.1} parent=27 // pred_check
          %p174 = pneg %p69
        $region34: #{tpu_custom_call.1} parent=27 // pred_check_branch
          %176 = sbr.rel (%p174) target = $region36
        $region35: #{tpu_custom_call.1} parent=27 // pred_region
          %178 = dma.done %s170, 128
        $region36: #{tpu_custom_call.1} parent=27 // pred_fallthru
          _
        %s179 = sand.u32 %s30, 1
        %s180 = scalar_lea.sflag [#allocation3], %s179
        %s181 = sand.u32 %s30, 1
        %s182 = smul.addr %s181, 8
        %s183 = scalar_lea.vmem [#allocation2], %s182
        %p184 = pneg %p43
        %p185 = pneg %p40
        %s186 = sand.u32 %s56, 1
        %s187 = scalar_lea.sflag [#allocation6], %s186
        %s188 = sand.u32 %s56, 1
        %s189 = smul.addr %s188, 8
        %s190 = scalar_lea.vmem [#allocation5], %s189
        %p191 = pneg %p69
        %p192 = pneg %p66
        %p193 = pneg %p95
        %p194 = pneg %p92
        %s195 = sand.u32 %s82, 1
        %s196 = scalar_lea.sflag [#allocation4], %s195
        %s197 = sand.u32 %s82, 1
        %s198 = smul.addr %s197, 8
        %s199 = scalar_lea.vmem [#allocation7], %s198
        %v200 = vld [vmem:[%s163] sm:$0xff]
        %v201 = vld [vmem:[%s173] sm:$0xff]
        %v202 = vand.u32 2147483647, %v200
        %v203 = vsub.f32 0.0, %v202
        %v204 = vmul.f32 %v203, 1.442695
        %v205 = vpow.pop %v204
        %v206 = vmax.f32 %v200, 0.0
        %v207 = vmul.f32 %v200, %v201
        %v208 = vsub.f32 %v206, %v207
        %v209 = vadd.f32 %v205, 1.0
        %v210 = vlog2.pop %v209
        %v211 = vmul.f32 %v210, 0.6931472
        %v212 = vmul.f32 -0.5, %v205
        %v213 = vadd.f32 %v212, 1.0
        %v214 = vmul.f32 %v213, %v205
        %v215 = vand.u32 2147483647, %v205
        %vm216 = vcmp.lt.f32.partialorder %v215, 0.0004427343
        %v217 = vsel %vm216, %v214, %v211
        %v218 = vadd.f32 %v208, %v217
        %v219 = vadd.f32 %v205, 1.0
        %v220 = vrcp.pop %v219
        %v221 = vmul.f32 %v219, %v220
        %v222 = vsub.f32 1.0, %v221
        %v223 = vmul.f32 %v220, %v222
        %v224 = vadd.f32 %v220, %v223
        %vm225 = vweird.f32 %v219
        %vm226 = vweird.f32 %v220
        %vm227 = vmor %vm225, %vm226
        %v228 = vsel %vm227, %v220, %v224
        %v229 = vand.u32 2147483647, %v219
        %vm230 = vcmp.eq.f32.partialorder %v229, 8.507059e+37
        %v231 = vand.u32 %v219, 2147483648
        %v232 = vor.u32 1.1754944e-38, %v231
        %v233 = vsel %vm230, %v232, %v228
        %vm234 = vcmp.ge.f32.partialorder %v200, 0.0
        %v235 = vmul.f32 %v205, %v233
        %v236 = vsel %vm234, %v233, %v235
        %v237 = vmul.f32 %v201, -0.5
        %v238 = vadd.f32 %v237, 0.75
        %v239 = vsub.f32 %v201, %v236
        %v240 = vand.u32 2147483647, %v239
        %v241 = vrsqrt.pop %v240
        %v242 = vmul.f32 %v241, %v240
        %v243 = vmul.f32 %v242, %v241
        %v244 = vmul.f32 0.5, %v243
        %v245 = vsub.f32 1.5, %v244
        %v246 = vmul.f32 %v241, %v245
        %v247 = vmul.f32 %v240, %v246
        %vm248 = vcmp.eq.f32.partialorder %v240, inf
        %v249 = vsel %vm248, %v240, %v247
        %vm250 = vcmp.eq.f32.partialorder %v240, 0.0
        %v251 = vand.u32 %v240, 2147483648
        %v252 = vsel %vm250, %v251, %v249
        %v253 = vmul.f32 %v240, %v252
        %v254 = vmul.f32 %v218, %v238
        %v255 = vmul.f32 %v254, %v253
        %v256 = vadd.f32 %v255, 0.0
        %v257 = vadd.f32 %v256, 0.0
        %258 = vst [vmem:[%s199] sm:$0xff] %v257
        %s259 = sand.u32 %s82, 1
        %s260 = scalar_lea.sflag [#allocation4], %s259
        %s261 = sand.u32 %s82, 1
        %s262 = smul.addr %s261, 8
        %s263 = scalar_lea.vmem [#allocation7], %s262
        // Predicated region
        $region37: #{tpu_custom_call.1} parent=27 // pred_check
          %p264 = pneg %p92
        $region38: #{tpu_custom_call.1} parent=27 // pred_check_branch
          %266 = sbr.rel (%p264) target = $region40
        $region39: #{tpu_custom_call.1} parent=27 // pred_region
          %268 = vsyncadd %s260, 0
          %s269 = smul.addr %s22, 8
          %s270 = scalar_lea.hbm %s2, %s269
          %s272 = sshll.u32 %s263, 4
          %s273 = int_to_ptr.vmem [resolvable:$true] %s272
          %s274 = sshll.u32 %s270, 4
          %s275 = int_to_ptr.hbm [resolvable:$true] %s274
          %277 = dma.vmem_to_hbm [thread:$0]  %s273, 128, %s275, %s260
        $region40: #{tpu_custom_call.1} parent=27 // pred_fallthru
          _
      $region28: #{tpu_custom_call.1} parent=5 // pred_fallthru
        _
      %p278 = scmp.le.s32.totalorder 2, %s17
      // Predicated region
      $region41: #{tpu_custom_call.1} parent=5 // pred_check
        %p279 = pneg %p278
      $region42: #{tpu_custom_call.1} parent=5 // pred_check_branch
        %281 = sbr.rel (%p279) target = $region44
      $region43: #{tpu_custom_call.1} parent=5 // pred_region
        %s282 = ssub.s32 %s17, 2
        // Predicated region
        $region45: #{tpu_custom_call.1} parent=43 // pred_check
          %p283 = pneg %p98
        $region46: #{tpu_custom_call.1} parent=43 // pred_check_branch
          %285 = sbr.rel (%p283) target = $region48
        $region47: #{tpu_custom_call.1} parent=43 // pred_region
          %s286 = sand.u32 %s83, 1
          %s287 = scalar_lea.sflag [#allocation4], %s286
          %s288 = sand.u32 %s83, 1
          %s289 = smul.addr %s288, 8
          %s290 = scalar_lea.vmem [#allocation7], %s289
          %292 = dma.done %s287, 128
        $region48: #{tpu_custom_call.1} parent=43 // pred_fallthru
          _
      $region44: #{tpu_custom_call.1} parent=5 // pred_fallthru
        _
    $region6: #{tpu_custom_call.1} parent=1 // loop_footer
      %s21 = sadd.s32 1, %s17
    $region7: #{tpu_custom_call.1} parent=1 // loop_footer_branch
      %16 = sbr.rel target = $region3
    $region8: #{tpu_custom_call.1} parent=1 // loop_exit
      _
    %293 = vsyncpa [#allocation3], 1
    %s294 = scalar_lea.sflag [#allocation3], 1
    %295 = vsyncpa %s294, 1
    %296 = vsyncpa [#allocation6], 1
    %s297 = scalar_lea.sflag [#allocation6], 1
    %298 = vsyncpa %s297, 1
    %299 = vsyncpa [#allocation4], 1
    %s300 = scalar_lea.sflag [#allocation4], 1
    %301 = vsyncpa %s300, 1

</llo_original>
